<compile_context>
chip_gen: v5e
topology: v5e:2x2
jax: 0.10.0
libtpu: 0.0.40
codegen_flags: <defaults>
</compile_context>

<pallas_src>
import functools
import math

import jax
import jax.numpy as jnp
from jax.experimental import pallas as pl
from jax.experimental.pallas import tpu as pltpu


def _round_up(v: int, m: int) -> int:
    return ((v + m - 1) // m) * m


def _pick_tile(dim_pad: int, max_tile: int) -> int:
    """Largest multiple of 128 that divides dim_pad and is <= max_tile."""
    best = 128
    for t in range(128, min(dim_pad, max_tile) + 1, 128):
        if dim_pad % t == 0:
            best = t
    return best


def _linear_kernel(x_ref, w_ref, b_ref, o_ref):
    # x_ref: (B, tk)   activation slice
    # w_ref: (tk, tn)  pre-transposed weight tile (plain MXU matmul, no XLU)
    # b_ref: (1, tn)   bias tile
    # o_ref: (B, tn)   f32 output tile, used directly as the accumulator
    #                  (block index constant across the k grid axis)
    k = pl.program_id(1)

    @pl.when(k == 0)
    def _():
        o_ref[...] = jnp.zeros_like(o_ref)

    o_ref[...] += jnp.dot(x_ref[...], w_ref[...], preferred_element_type=jnp.float32)

    @pl.when(k == pl.num_programs(1) - 1)
    def _():
        o_ref[...] += b_ref[...]  # bias added exactly once, at the last K step


def linear_head(x_flat, w_t, b_row, *, tn_max=512, tk_max=4096):
    """logits_padded = x_flat @ w_t + b_row via a tiled Pallas matmul.

    x_flat: (B, K) f32; w_t: (K_pad, N_pad) f32 (pre-folded/padded/transposed
    at init); b_row: (1, N_pad) f32. Returns (B, N_pad) f32.
    """
    B, k_x = x_flat.shape
    k_pad, n_pad = w_t.shape
    if k_x != k_pad:  # tiny activation-side pad only (weight is prepped offline)
        x_flat = jnp.pad(x_flat, ((0, 0), (0, k_pad - k_x)))

    tk = _pick_tile(k_pad, tk_max)
    tn = _pick_tile(n_pad, tn_max)
    grid = (n_pad // tn, k_pad // tk)  # (output cols: parallel, K: reduction last)

    cost = pl.CostEstimate(
        flops=2 * B * k_pad * n_pad,
        transcendentals=0,
        bytes_accessed=4 * (k_pad * n_pad + B * k_pad * grid[0] + B * n_pad + n_pad),
    )

    return pl.pallas_call(
        _linear_kernel,
        out_shape=jax.ShapeDtypeStruct((B, n_pad), jnp.float32),
        grid=grid,
        in_specs=[
            pl.BlockSpec((B, tk), lambda j, k: (0, k)),    # x: stream over K
            pl.BlockSpec((tk, tn), lambda j, k: (k, j)),   # W: (K, N) tiles
            pl.BlockSpec((1, tn), lambda j, k: (0, j)),    # bias tile
        ],
        out_specs=pl.BlockSpec((B, tn), lambda j, k: (0, j)),
        compiler_params=pltpu.CompilerParams(
            dimension_semantics=("parallel", "arbitrary"),
            vmem_limit_bytes=48 * 1024 * 1024,  # safe on v7x (64 MiB), ample on v5e/v6e
        ),
        cost_estimate=cost,
    )(x_flat, w_t, b_row)


def prepare_head_params(weight, bias, hw):
    """One-time offline parameter prep (kept OUT of the jitted forward).

    weight: (num_classes, 3*hw) in nn.Linear (N, K) layout; bias: (num_classes,).
    Folds the x.repeat(1,3,1,1) into the weight, zero-pads N/K to multiples of
    128, and transposes to (K_pad, N_pad) so the kernel is a plain MXU matmul.
    """
    num_classes = weight.shape[0]
    # Channel-major flatten: the 3 identical channel copies of x multiply the 3
    # contiguous hw-chunks of W -> summing the chunks is mathematically exact.
    w_eff = weight[:, :hw] + weight[:, hw:2 * hw] + weight[:, 2 * hw:3 * hw]
    k_pad = _round_up(hw, 128)
    n_pad = _round_up(num_classes, 128)
    w_t = jnp.pad(w_eff, ((0, n_pad - num_classes), (0, k_pad - hw))).T  # (K_pad, N_pad)
    b_row = jnp.pad(bias, (0, n_pad - num_classes)).reshape(1, n_pad)
    return jnp.asarray(w_t), jnp.asarray(b_row)


@functools.partial(jax.jit, static_argnames=("num_classes",))
def wrapped_vit_forward(x, w_t, b_row, num_classes):
    """Pallas stand-in for WrappedViT.forward.

    x: (B, 1, H, W) f32. The 3x channel repeat of the PyTorch forward is folded
    into w_t at init (identical result), so only the single-channel input is
    flattened and fed to the linear head.
    """
    x_flat = x.reshape(x.shape[0], -1)           # nn.Flatten equivalent (C-order)
    logits = linear_head(x_flat, w_t, b_row)
    return logits[:, :num_classes]


def init_params(fan_in, num_classes, key):
    """Deterministic init matching nn.Linear's default U(-1/sqrt(fan_in), +)."""
    bound = 1.0 / math.sqrt(fan_in)
    k_w, k_b = jax.random.split(key)
    weight = jax.random.uniform(
        k_w, (num_classes, fan_in), minval=-bound, maxval=bound, dtype=jnp.float32
    )
    bias = jax.random.uniform(
        k_b, (num_classes,), minval=-bound, maxval=bound, dtype=jnp.float32
    )
    return weight, bias


if __name__ == "__main__":
    batch = 2
    input_size = 16        # small spatial size for the demo (real ViT uses 224)
    num_classes = 1000     # ViT-base-patch16-224 logits dimension
    hw = input_size * input_size

    key = jax.random.PRNGKey(0)
    k_x, k_p = jax.random.split(key)

    x = jax.random.normal(k_x, (batch, 1, input_size, input_size), dtype=jnp.float32)
    weight, bias = init_params(3 * hw, num_classes, k_p)

    # One-time offline layout prep (fold channel repeat, pad, transpose).
    w_t, b_row = prepare_head_params(weight, bias, hw)

    logits = wrapped_vit_forward(x, w_t, b_row, num_classes)
    logits = jax.block_until_ready(logits)

    # Plain-JAX reference of the ORIGINAL forward: repeat channels -> flatten
    # -> x @ W^T + b (unfolded, unpadded weights).
    x_ref = jnp.tile(x, (1, 3, 1, 1)).reshape(batch, -1)
    ref = x_ref @ weight.T + bias
    assert logits.shape == (batch, num_classes)
    assert jnp.allclose(logits, ref, atol=1e-3, rtol=1e-3)

    print("KERNEL_OK")
</pallas_src>

<mosaic_0001>
module attributes {stable_mosaic.version = 11 : i64} {
  func.func @_linear_kernel(%arg0: i32, %arg1: i32, %arg2: memref<2x256xf32, #tpu.memory_space<vmem>>, %arg3: memref<256x512xf32, #tpu.memory_space<vmem>>, %arg4: memref<1x512xf32, #tpu.memory_space<vmem>>, %arg5: memref<2x512xf32, #tpu.memory_space<vmem>>) attributes {dimension_semantics = [#tpu.dimension_semantics<parallel>, #tpu.dimension_semantics<arbitrary>], iteration_bounds = array<i64: 2, 1>, scalar_prefetch = 0 : i64, scratch_operands = 0 : i64, tpu.core_type = #tpu.core_type<tc>, window_params = [{transform_indices = @transform_0, window_bounds = array<i64: 2, 256>}, {transform_indices = @transform_1, window_bounds = array<i64: 256, 512>}, {transform_indices = @transform_2, window_bounds = array<i64: 1, 512>}, {transform_indices = @transform_3, window_bounds = array<i64: 2, 512>}]} {
    %c0_i32 = arith.constant 0 : i32
    %0 = arith.cmpi eq, %arg1, %c0_i32 : i32
    %1 = arith.extui %0 : i1 to i32
    %c0_i32_0 = arith.constant 0 : i32
    %2 = arith.cmpi ne, %1, %c0_i32_0 : i32
    scf.if %2 {
      %cst_10 = arith.constant 0.000000e+00 : f32
      %12 = vector.broadcast %cst_10 : f32 to vector<2x512xf32>
      %c0_11 = arith.constant 0 : index
      %c0_12 = arith.constant 0 : index
      %13 = vector.load %arg5[%c0_11, %c0_12] : memref<2x512xf32, #tpu.memory_space<vmem>>, vector<2x512xf32>
      tpu.vector_store %arg5[%c0_11, %c0_12], %12 {strides = array<i32>} : memref<2x512xf32, #tpu.memory_space<vmem>>, vector<2x512xf32>,
    } else {
    }
    %c0 = arith.constant 0 : index
    %c0_1 = arith.constant 0 : index
    %3 = vector.load %arg5[%c0, %c0_1] : memref<2x512xf32, #tpu.memory_space<vmem>>, vector<2x512xf32>
    %c0_2 = arith.constant 0 : index
    %c0_3 = arith.constant 0 : index
    %4 = vector.load %arg2[%c0_2, %c0_3] : memref<2x256xf32, #tpu.memory_space<vmem>>, vector<2x256xf32>
    %c0_4 = arith.constant 0 : index
    %c0_5 = arith.constant 0 : index
    %5 = vector.load %arg3[%c0_4, %c0_5] : memref<256x512xf32, #tpu.memory_space<vmem>>, vector<256x512xf32>
    %cst = arith.constant dense<0.000000e+00> : vector<2x512xf32>
    %6 = tpu.matmul %4, %5, %cst {dimension_numbers = #tpu.dot_dimension_numbers<[1], [0], [0], [1], [0, 0, 1, 1], [], []>} : vector<2x256xf32>, vector<256x512xf32>, vector<2x512xf32> -> vector<2x512xf32>
    %7 = arith.addf %3, %6 : vector<2x512xf32>
    %c0_6 = arith.constant 0 : index
    %c0_7 = arith.constant 0 : index
    %8 = vector.load %arg5[%c0_6, %c0_7] : memref<2x512xf32, #tpu.memory_space<vmem>>, vector<2x512xf32>
    tpu.vector_store %arg5[%c0_6, %c0_7], %7 {strides = array<i32>} : memref<2x512xf32, #tpu.memory_space<vmem>>, vector<2x512xf32>,
    %c0_i32_8 = arith.constant 0 : i32
    %9 = arith.cmpi eq, %arg1, %c0_i32_8 : i32
    %10 = arith.extui %9 : i1 to i32
    %c0_i32_9 = arith.constant 0 : i32
    %11 = arith.cmpi ne, %10, %c0_i32_9 : i32
    scf.if %11 {
      %c0_10 = arith.constant 0 : index
      %c0_11 = arith.constant 0 : index
      %12 = vector.load %arg5[%c0_10, %c0_11] : memref<2x512xf32, #tpu.memory_space<vmem>>, vector<2x512xf32>
      %c0_12 = arith.constant 0 : index
      %c0_13 = arith.constant 0 : index
      %13 = vector.load %arg4[%c0_12, %c0_13] : memref<1x512xf32, #tpu.memory_space<vmem>>, vector<1x512xf32>
      %14 = vector.broadcast %13 : vector<1x512xf32> to vector<2x512xf32>
      %15 = arith.addf %12, %14 : vector<2x512xf32>
      %c0_14 = arith.constant 0 : index
      %c0_15 = arith.constant 0 : index
      %16 = vector.load %arg5[%c0_14, %c0_15] : memref<2x512xf32, #tpu.memory_space<vmem>>, vector<2x512xf32>
      tpu.vector_store %arg5[%c0_14, %c0_15], %15 {strides = array<i32>} : memref<2x512xf32, #tpu.memory_space<vmem>>, vector<2x512xf32>,
    } else {
    }
    return
  }
  func.func @transform_0(%arg0: i32, %arg1: i32) -> (i32, i32) {
    %c0_i32 = arith.constant 0 : i32
    %c0_i32_0 = arith.constant 0 : i32
    return %c0_i32, %arg1 : i32, i32
  }
  func.func @transform_1(%arg0: i32, %arg1: i32) -> (i32, i32) {
    %c0_i32 = arith.constant 0 : i32
    return %arg1, %arg0 : i32, i32
  }
  func.func @transform_2(%arg0: i32, %arg1: i32) -> (i32, i32) {
    %c0_i32 = arith.constant 0 : i32
    %c0_i32_0 = arith.constant 0 : i32
    return %c0_i32, %arg0 : i32, i32
  }
  func.func @transform_3(%arg0: i32, %arg1: i32) -> (i32, i32) {
    %c0_i32 = arith.constant 0 : i32
    %c0_i32_0 = arith.constant 0 : i32
    return %c0_i32, %arg0 : i32, i32
  }
}

</mosaic_0001>

<llo_original>
// kernel: wrapped_vit_forward.1
$region0: #{wrapped_vit_forward.1}
  #allocation0 [shape = 'u32[]', space=smem, size = 0x4, offset = 0x4, fixed_abs, tag = 'smem constant byte address 0x4 - core index']
  #allocation1 [shape = 'u32[72,128]{1,0:T(1,128)}', space=vmem, size = 0x9000, scoped, tag = 'internal scratch']
  %s0 = inlined_call_operand.vmem [shape: f32[2,256], index: 0, kind: input, shape index: {}]
  %s1 = inlined_call_operand.hbm [shape: f32[256,1024], index: 1, kind: input, shape index: {}]
  %s2 = inlined_call_operand.vmem [shape: f32[1,1024], index: 2, kind: input, shape index: {}]
  %s3 = inlined_call_operand.hbm [shape: f32[2,1024], index: 3, kind: output, shape index: {}]
  %s4 = sld [smem:[#allocation0]]
  $region57: #{wrapped_vit_forward.1} parent=0
    _
  %s6 = ssub.s32 1, %s4
  %s7 = scalar_select 0, %s6, %s4
  $region1: #{wrapped_vit_forward.1} parent=0
    #allocation2 [shape = 'u8[1048576]{0}', space=vmem, size = 0x100000, scoped, tag = 'input window, operand 1']
    #allocation3 [shape = 's32[2]{0}', space=sflag, size = 0x8, scoped, tag = 'scoped memory for wrapped_vit_forward.1']
    #allocation4 [shape = 's32[2]{0}', space=sflag, size = 0x8, scoped, tag = 'scoped memory for wrapped_vit_forward.1']
    #allocation5 [shape = 'u8[8192]{0}', space=vmem, size = 0x2000, scoped, tag = 'output window, operand 0']
    %8 = vsyncpa [#allocation3], 0
    %s9 = scalar_lea.sflag [#allocation3], 1
    %10 = vsyncpa %s9, 0
    %11 = vsyncpa [#allocation4], 0
    %s12 = scalar_lea.sflag [#allocation4], 1
    %13 = vsyncpa %s12, 0
    loop: start=0, step=1, limit=4
    $region2: #{wrapped_vit_forward.1} parent=1 // loop_pre_header
      _
    $region3: #{wrapped_vit_forward.1} parent=1 // loop_header
      %s15 = sphi 0, %s19
      %p16 = scmp.ge.s32.totalorder %s15, 4
      %s22 = sphi 0, %s34
      %s23 = sphi 0, %s30
      %s24 = sphi 0, %s22
      %s25 = sphi 0, %s23
      %s26 = sphi 0, %s24
      %s27 = sphi 0, %s25
      %s37 = sphi 0, %s39
      %s40 = sphi 0, %s37
      %s41 = sphi 0, %s40
      %s57 = sphi 0, %s41
      %s65 = sphi 0, %s67
      %s68 = sphi 0, %s65
      %s69 = sphi 0, %s68
      %s85 = sphi 0, %s69
      %s91 = sphi 0, %s93
      %s94 = sphi 0, %s91
      %s95 = sphi 0, %s94
      %s111 = sphi 0, %s95
      %s117 = sphi 0, %s119
      %s120 = sphi 0, %s117
      %s121 = sphi 0, %s120
      %s137 = sphi 0, %s121
    $region4: #{wrapped_vit_forward.1} parent=1 // loop_header_branch
      %18 = sbr.rel (%p16) target = $region8
    $region5: #{wrapped_vit_forward.1} parent=1 // loop_body
      %s20 = ssub.s32 %s15, 1
      %s21 = ssub.s32 %s15, 2
      %s28 = sadd.s32 1, %s23
      %p29 = scmp.ge.s32.totalorder %s28, 1
      %s30 = scalar_select %p29, 0, %s28
      %s31 = sadd.s32 1, %s22
      %s32 = scalar_select %p29, %s31, %s22
      %p33 = scmp.ge.s32.totalorder %s32, 2
      %s34 = scalar_select %p33, 0, %s32
      %s35 = ssub.s32 %s23, %s30
      %p36 = scmp.eq.s32.totalorder %s35, 0
      %s38 = sadd.s32 %s37, 1
      %s39 = scalar_select %p36, %s37, %s38
      %p42 = pneg %p36
      %p43 = scmp.eq.s32.totalorder %s15, 1
      %p44 = por %p42, %p43
      %p45 = scmp.ne.s32.totalorder %s37, %s40
      %p46 = scmp.eq.s32.totalorder %s15, 0
      %p47 = por %p45, %p46
      %p48 = scmp.ne.s32.totalorder %s37, %s40
      %p49 = scmp.eq.s32.totalorder %s20, 1
      %p50 = por %p48, %p49
      %p51 = scmp.ne.s32.totalorder %s40, %s41
      %p52 = scmp.eq.s32.totalorder %s20, 0
      %p53 = por %p51, %p52
      %p54 = scmp.ne.s32.totalorder %s40, %s41
      %p55 = scmp.eq.s32.totalorder %s21, 1
      %p56 = por %p54, %p55
      %p58 = scmp.ne.s32.totalorder %s41, %s57
      %p59 = scmp.eq.s32.totalorder %s21, 0
      %p60 = por %p58, %p59
      %s61 = ssub.s32 %s23, %s30
      %s62 = ssub.s32 %s22, %s34
      %s63 = sor.u32 %s61, %s62
      %p64 = scmp.eq.s32.totalorder %s63, 0
      %s66 = sadd.s32 %s65, 1
      %s67 = scalar_select %p64, %s65, %s66
      %p70 = pneg %p64
      %p71 = scmp.eq.s32.totalorder %s15, 1
      %p72 = por %p70, %p71
      %p73 = scmp.ne.s32.totalorder %s65, %s68
      %p74 = scmp.eq.s32.totalorder %s15, 0
      %p75 = por %p73, %p74
      %p76 = scmp.ne.s32.totalorder %s65, %s68
      %p77 = scmp.eq.s32.totalorder %s20, 1
      %p78 = por %p76, %p77
      %p79 = scmp.ne.s32.totalorder %s68, %s69
      %p80 = scmp.eq.s32.totalorder %s20, 0
      %p81 = por %p79, %p80
      %p82 = scmp.ne.s32.totalorder %s68, %s69
      %p83 = scmp.eq.s32.totalorder %s21, 1
      %p84 = por %p82, %p83
      %p86 = scmp.ne.s32.totalorder %s69, %s85
      %p87 = scmp.eq.s32.totalorder %s21, 0
      %p88 = por %p86, %p87
      %s89 = ssub.s32 %s22, %s34
      %p90 = scmp.eq.s32.totalorder %s89, 0
      %s92 = sadd.s32 %s91, 1
      %s93 = scalar_select %p90, %s91, %s92
      %p96 = pneg %p90
      %p97 = scmp.eq.s32.totalorder %s15, 1
      %p98 = por %p96, %p97
      %p99 = scmp.ne.s32.totalorder %s91, %s94
      %p100 = scmp.eq.s32.totalorder %s15, 0
      %p101 = por %p99, %p100
      %p102 = scmp.ne.s32.totalorder %s91, %s94
      %p103 = scmp.eq.s32.totalorder %s20, 1
      %p104 = por %p102, %p103
      %p105 = scmp.ne.s32.totalorder %s94, %s95
      %p106 = scmp.eq.s32.totalorder %s20, 0
      %p107 = por %p105, %p106
      %p108 = scmp.ne.s32.totalorder %s94, %s95
      %p109 = scmp.eq.s32.totalorder %s21, 1
      %p110 = por %p108, %p109
      %p112 = scmp.ne.s32.totalorder %s95, %s111
      %p113 = scmp.eq.s32.totalorder %s21, 0
      %p114 = por %p112, %p113
      %s115 = ssub.s32 %s22, %s34
      %p116 = scmp.eq.s32.totalorder %s115, 0
      %s118 = sadd.s32 %s117, 1
      %s119 = scalar_select %p116, %s117, %s118
      %p122 = pneg %p116
      %p123 = scmp.eq.s32.totalorder %s15, 1
      %p124 = por %p122, %p123
      %p125 = scmp.ne.s32.totalorder %s117, %s120
      %p126 = scmp.eq.s32.totalorder %s15, 0
      %p127 = por %p125, %p126
      %p128 = scmp.ne.s32.totalorder %s117, %s120
      %p129 = scmp.eq.s32.totalorder %s20, 1
      %p130 = por %p128, %p129
      %p131 = scmp.ne.s32.totalorder %s120, %s121
      %p132 = scmp.eq.s32.totalorder %s20, 0
      %p133 = por %p131, %p132
      %p134 = scmp.ne.s32.totalorder %s120, %s121
      %p135 = scmp.eq.s32.totalorder %s21, 1
      %p136 = por %p134, %p135
      %p138 = scmp.ne.s32.totalorder %s121, %s137
      %p139 = scmp.eq.s32.totalorder %s21, 0
      %p140 = por %p138, %p139
      %p141 = scmp.le.s32.totalorder 1, %s15
      %p142 = scmp.lt.s32.totalorder %s15, 3
      %p143 = pnand %p141, %p142
      %p144 = pneg %p143
      // Predicated region
      $region9: #{wrapped_vit_forward.1} parent=5 // pred_check
        _
      $region10: #{wrapped_vit_forward.1} parent=5 // pred_check_branch
        %146 = sbr.rel (%p143) target = $region12
      $region11: #{wrapped_vit_forward.1} parent=5 // pred_region
        %s147 = ssub.s32 %s15, 1
        // Predicated region
        $region13: #{wrapped_vit_forward.1} parent=11 // pred_check
          %p148 = pneg %p53
        $region14: #{wrapped_vit_forward.1} parent=11 // pred_check_branch
          %150 = sbr.rel (%p148) target = $region16
        $region15: #{wrapped_vit_forward.1} parent=11 // pred_region
          %s151 = smul.u32 2, %s25
          %p152 = scmp.lt.s32.totalorder %s151, 1
          %s153 = scalar_select %p152, %s151, 1
          %s154 = smul.addr %s153, 2
          %s155 = scalar_lea.vmem %s0, %s154
          %s156 = smul.u32 2, %s25
        $region16: #{wrapped_vit_forward.1} parent=11 // pred_fallthru
          _
      $region12: #{wrapped_vit_forward.1} parent=5 // pred_fallthru
        _
      %p157 = scmp.lt.s32.totalorder %s15, 2
      // Predicated region
      $region17: #{wrapped_vit_forward.1} parent=5 // pred_check
        %p158 = pneg %p157
      $region18: #{wrapped_vit_forward.1} parent=5 // pred_check_branch
        %160 = sbr.rel (%p158) target = $region20
      $region19: #{wrapped_vit_forward.1} parent=5 // pred_region
        // Predicated region
        $region21: #{wrapped_vit_forward.1} parent=19 // pred_check
          %p161 = pneg %p75
        $region22: #{wrapped_vit_forward.1} parent=19 // pred_check_branch
          %163 = sbr.rel (%p161) target = $region24
        $region23: #{wrapped_vit_forward.1} parent=19 // pred_region
          %s164 = sand.u32 %s65, 1
          %s165 = scalar_lea.sflag [#allocation3], %s164
          %s166 = sand.u32 %s65, 1
          %s167 = smul.addr %s166, 1024
          %s168 = scalar_lea.vmem [#allocation2], %s167
          %s169 = smul.u32 32, %s23
          %s170 = smul.u32 4, %s22
          %172 = vsyncadd %s165, 0
          %s173 = smul.addr %s169, 8
          %s174 = sadd.s32 %s170, %s173
          %s175 = smul.addr %s174, 8
          %s176 = scalar_lea.hbm %s1, %s175
          %s177 = sshll.u32 %s176, 4
          %s178 = int_to_ptr.hbm [resolvable:$true] %s177
          %s179 = sshll.u32 %s168, 4
          %s180 = int_to_ptr.vmem [resolvable:$true] %s179
          %185 = dma.hbm_to_vmem [thread:$0]  %s178, 16384, %s180, %s165, 1024, 512, 32
        $region24: #{wrapped_vit_forward.1} parent=19 // pred_fallthru
          _
        // Predicated region
        $region25: #{wrapped_vit_forward.1} parent=19 // pred_check
          %p186 = pneg %p101
        $region26: #{wrapped_vit_forward.1} parent=19 // pred_check_branch
          %188 = sbr.rel (%p186) target = $region28
        $region27: #{wrapped_vit_forward.1} parent=19 // pred_region
          %s189 = smul.u32 4, %s22
          %p190 = scmp.lt.s32.totalorder %s189, 7
          %s191 = scalar_select %p190, %s189, 7
          %s192 = scalar_lea.vmem %s2, %s191
          %s193 = smul.u32 4, %s22
        $region28: #{wrapped_vit_forward.1} parent=19 // pred_fallthru
          _
      $region20: #{wrapped_vit_forward.1} parent=5 // pred_fallthru
        _
      %p194 = scmp.le.s32.totalorder 1, %s15
      %p195 = scmp.lt.s32.totalorder %s15, 3
      %p196 = pnand %p194, %p195
      %p197 = pneg %p196
      // Predicated region
      $region29: #{wrapped_vit_forward.1} parent=5 // pred_check
        _
      $region30: #{wrapped_vit_forward.1} parent=5 // pred_check_branch
        %199 = sbr.rel (%p196) target = $region32
      $region31: #{wrapped_vit_forward.1} parent=5 // pred_region
        %s200 = ssub.s32 %s15, 1
        %s201 = sand.u32 %s68, 1
        %s202 = scalar_lea.sflag [#allocation3], %s201
        %s203 = sand.u32 %s68, 1
        %s204 = smul.addr %s203, 1024
        %s205 = scalar_lea.vmem [#allocation2], %s204
        // Predicated region
        $region33: #{wrapped_vit_forward.1} parent=31 // pred_check
          %p206 = pneg %p81
        $region34: #{wrapped_vit_forward.1} parent=31 // pred_check_branch
          %208 = sbr.rel (%p206) target = $region36
        $region35: #{wrapped_vit_forward.1} parent=31 // pred_region
          %210 = dma.done %s202, 16384
        $region36: #{wrapped_vit_forward.1} parent=31 // pred_fallthru
          _
        %s211 = smul.u32 2, %s25
        %p212 = scmp.lt.s32.totalorder %s211, 1
        %s213 = scalar_select %p212, %s211, 1
        %s214 = smul.addr %s213, 2
        %s215 = scalar_lea.vmem %s0, %s214
        %p216 = pneg %p53
        %p217 = pneg %p50
        %s218 = sand.u32 %s68, 1
        %s219 = scalar_lea.sflag [#allocation3], %s218
        %s220 = sand.u32 %s68, 1
        %s221 = smul.addr %s220, 1024
        %s222 = scalar_lea.vmem [#allocation2], %s221
        %p223 = pneg %p81
        %p224 = pneg %p78
        %s225 = smul.u32 4, %s24
        %p226 = scmp.lt.s32.totalorder %s225, 7
        %s227 = scalar_select %p226, %s225, 7
        %s228 = scalar_lea.vmem %s2, %s227
        %p229 = pneg %p107
        %p230 = pneg %p104
        %p231 = pneg %p133
        %p232 = pneg %p130
        %s233 = sand.u32 %s120, 1
        %s234 = scalar_lea.sflag [#allocation4], %s233
        %s235 = sand.u32 %s120, 1
        %s236 = smul.addr %s235, 8
        %s237 = scalar_lea.vmem [#allocation5], %s236
        %s238 = smul.u32 2, %s25
        %p239 = scmp.lt.s32.totalorder %s238, 1
        %s240 = scalar_select %p239, %s238, 1
        %s241 = smul.addr %s240, 2
        %s242 = scalar_lea.vmem %s0, %s241
        %s243 = smul.u32 2, %s25
        %s244 = smul.u32 32, %s25
        %s245 = smul.u32 4, %s24
        %s246 = smul.u32 4, %s24
        %p247 = scmp.lt.s32.totalorder %s246, 7
        %s248 = scalar_select %p247, %s246, 7
        %s249 = scalar_lea.vmem %s2, %s248
        %s250 = smul.u32 4, %s24
        %s251 = smul.u32 4, %s24
        %p252 = scmp.eq.s32.totalorder %s25, 0
        // Predicated region
        $region37: #{wrapped_vit_forward.1} parent=31 // pred_check
          %p253 = pneg %p252
        $region38: #{wrapped_vit_forward.1} parent=31 // pred_check_branch
          %255 = sbr.rel (%p253) target = $region40
        $region39: #{wrapped_vit_forward.1} parent=31 // pred_region
          %256 = vst [vmem:[%s237] sm:$0xff] 0.0
        $region40: #{wrapped_vit_forward.1} parent=31 // pred_fallthru
          _
        %v257 = vld [vmem:[%s237] sm:$0xff]
        %v258 = vld [vmem:[%s242] sm:$0xf]
        %v259 = vld [vmem:[%s205] sm:$0xff]
        %v260 = vld [vmem:[%s205 + $0x8] sm:$0xff]
        %v261 = vld [vmem:[%s205 + $0x10] sm:$0xff]
        %v262 = vld [vmem:[%s205 + $0x18] sm:$0xff]
        %v263 = vld [vmem:[%s205 + $0x20] sm:$0xff]
        %v264 = vld [vmem:[%s205 + $0x28] sm:$0xff]
        %v265 = vld [vmem:[%s205 + $0x30] sm:$0xff]
        %v266 = vld [vmem:[%s205 + $0x38] sm:$0xff]
        %v267 = vld [vmem:[%s205 + $0x40] sm:$0xff]
        %v268 = vld [vmem:[%s205 + $0x48] sm:$0xff]
        %v269 = vld [vmem:[%s205 + $0x50] sm:$0xff]
        %v270 = vld [vmem:[%s205 + $0x58] sm:$0xff]
        %v271 = vld [vmem:[%s205 + $0x60] sm:$0xff]
        %v272 = vld [vmem:[%s205 + $0x68] sm:$0xff]
        %v273 = vld [vmem:[%s205 + $0x70] sm:$0xff]
        %v274 = vld [vmem:[%s205 + $0x78] sm:$0xff]
        %v275 = vld [vmem:[%s205 + $0x80] sm:$0xff]
        %v276 = vld [vmem:[%s205 + $0x88] sm:$0xff]
        %v277 = vld [vmem:[%s205 + $0x90] sm:$0xff]
        %v278 = vld [vmem:[%s205 + $0x98] sm:$0xff]
        %v279 = vld [vmem:[%s205 + $0xa0] sm:$0xff]
        %v280 = vld [vmem:[%s205 + $0xa8] sm:$0xff]
        %v281 = vld [vmem:[%s205 + $0xb0] sm:$0xff]
        %v282 = vld [vmem:[%s205 + $0xb8] sm:$0xff]
        %v283 = vld [vmem:[%s205 + $0xc0] sm:$0xff]
        %v284 = vld [vmem:[%s205 + $0xc8] sm:$0xff]
        %v285 = vld [vmem:[%s205 + $0xd0] sm:$0xff]
        %v286 = vld [vmem:[%s205 + $0xd8] sm:$0xff]
        %v287 = vld [vmem:[%s205 + $0xe0] sm:$0xff]
        %v288 = vld [vmem:[%s205 + $0xe8] sm:$0xff]
        %v289 = vld [vmem:[%s205 + $0xf0] sm:$0xff]
        %v290 = vld [vmem:[%s205 + $0xf8] sm:$0xff]
        %v291 = vld [vmem:[%s205 + $0x100] sm:$0xff]
        %v292 = vld [vmem:[%s205 + $0x108] sm:$0xff]
        %v293 = vld [vmem:[%s205 + $0x110] sm:$0xff]
        %v294 = vld [vmem:[%s205 + $0x118] sm:$0xff]
        %v295 = vld [vmem:[%s205 + $0x120] sm:$0xff]
        %v296 = vld [vmem:[%s205 + $0x128] sm:$0xff]
        %v297 = vld [vmem:[%s205 + $0x130] sm:$0xff]
        %v298 = vld [vmem:[%s205 + $0x138] sm:$0xff]
        %v299 = vld [vmem:[%s205 + $0x140] sm:$0xff]
        %v300 = vld [vmem:[%s205 + $0x148] sm:$0xff]
        %v301 = vld [vmem:[%s205 + $0x150] sm:$0xff]
        %v302 = vld [vmem:[%s205 + $0x158] sm:$0xff]
        %v303 = vld [vmem:[%s205 + $0x160] sm:$0xff]
        %v304 = vld [vmem:[%s205 + $0x168] sm:$0xff]
        %v305 = vld [vmem:[%s205 + $0x170] sm:$0xff]
        %v306 = vld [vmem:[%s205 + $0x178] sm:$0xff]
        %v307 = vld [vmem:[%s205 + $0x180] sm:$0xff]
        %v308 = vld [vmem:[%s205 + $0x188] sm:$0xff]
        %v309 = vld [vmem:[%s205 + $0x190] sm:$0xff]
        %v310 = vld [vmem:[%s205 + $0x198] sm:$0xff]
        %v311 = vld [vmem:[%s205 + $0x1a0] sm:$0xff]
        %v312 = vld [vmem:[%s205 + $0x1a8] sm:$0xff]
        %v313 = vld [vmem:[%s205 + $0x1b0] sm:$0xff]
        %v314 = vld [vmem:[%s205 + $0x1b8] sm:$0xff]
        %v315 = vld [vmem:[%s205 + $0x1c0] sm:$0xff]
        %v316 = vld [vmem:[%s205 + $0x1c8] sm:$0xff]
        %v317 = vld [vmem:[%s205 + $0x1d0] sm:$0xff]
        %v318 = vld [vmem:[%s205 + $0x1d8] sm:$0xff]
        %v319 = vld [vmem:[%s205 + $0x1e0] sm:$0xff]
        %v320 = vld [vmem:[%s205 + $0x1e8] sm:$0xff]
        %v321 = vld [vmem:[%s205 + $0x1f0] sm:$0xff]
        %v322 = vld [vmem:[%s205 + $0x1f8] sm:$0xff]
        %v323 = vld [vmem:[%s205 + $0x200] sm:$0xff]
        %v324 = vld [vmem:[%s205 + $0x208] sm:$0xff]
        %v325 = vld [vmem:[%s205 + $0x210] sm:$0xff]
        %v326 = vld [vmem:[%s205 + $0x218] sm:$0xff]
        %v327 = vld [vmem:[%s205 + $0x220] sm:$0xff]
        %v328 = vld [vmem:[%s205 + $0x228] sm:$0xff]
        %v329 = vld [vmem:[%s205 + $0x230] sm:$0xff]
        %v330 = vld [vmem:[%s205 + $0x238] sm:$0xff]
        %v331 = vld [vmem:[%s205 + $0x240] sm:$0xff]
        %v332 = vld [vmem:[%s205 + $0x248] sm:$0xff]
        %v333 = vld [vmem:[%s205 + $0x250] sm:$0xff]
        %v334 = vld [vmem:[%s205 + $0x258] sm:$0xff]
        %v335 = vld [vmem:[%s205 + $0x260] sm:$0xff]
        %v336 = vld [vmem:[%s205 + $0x268] sm:$0xff]
        %v337 = vld [vmem:[%s205 + $0x270] sm:$0xff]
        %v338 = vld [vmem:[%s205 + $0x278] sm:$0xff]
        %v339 = vld [vmem:[%s205 + $0x280] sm:$0xff]
        %v340 = vld [vmem:[%s205 + $0x288] sm:$0xff]
        %v341 = vld [vmem:[%s205 + $0x290] sm:$0xff]
        %v342 = vld [vmem:[%s205 + $0x298] sm:$0xff]
        %v343 = vld [vmem:[%s205 + $0x2a0] sm:$0xff]
        %v344 = vld [vmem:[%s205 + $0x2a8] sm:$0xff]
        %v345 = vld [vmem:[%s205 + $0x2b0] sm:$0xff]
        %v346 = vld [vmem:[%s205 + $0x2b8] sm:$0xff]
        %v347 = vld [vmem:[%s205 + $0x2c0] sm:$0xff]
        %v348 = vld [vmem:[%s205 + $0x2c8] sm:$0xff]
        %v349 = vld [vmem:[%s205 + $0x2d0] sm:$0xff]
        %v350 = vld [vmem:[%s205 + $0x2d8] sm:$0xff]
        %v351 = vld [vmem:[%s205 + $0x2e0] sm:$0xff]
        %v352 = vld [vmem:[%s205 + $0x2e8] sm:$0xff]
        %v353 = vld [vmem:[%s205 + $0x2f0] sm:$0xff]
        %v354 = vld [vmem:[%s205 + $0x2f8] sm:$0xff]
        %v355 = vld [vmem:[%s205 + $0x300] sm:$0xff]
        %v356 = vld [vmem:[%s205 + $0x308] sm:$0xff]
        %v357 = vld [vmem:[%s205 + $0x310] sm:$0xff]
        %v358 = vld [vmem:[%s205 + $0x318] sm:$0xff]
        %v359 = vld [vmem:[%s205 + $0x320] sm:$0xff]
        %v360 = vld [vmem:[%s205 + $0x328] sm:$0xff]
        %v361 = vld [vmem:[%s205 + $0x330] sm:$0xff]
        %v362 = vld [vmem:[%s205 + $0x338] sm:$0xff]
        %v363 = vld [vmem:[%s205 + $0x340] sm:$0xff]
        %v364 = vld [vmem:[%s205 + $0x348] sm:$0xff]
        %v365 = vld [vmem:[%s205 + $0x350] sm:$0xff]
        %v366 = vld [vmem:[%s205 + $0x358] sm:$0xff]
        %v367 = vld [vmem:[%s205 + $0x360] sm:$0xff]
        %v368 = vld [vmem:[%s205 + $0x368] sm:$0xff]
        %v369 = vld [vmem:[%s205 + $0x370] sm:$0xff]
        %v370 = vld [vmem:[%s205 + $0x378] sm:$0xff]
        %v371 = vld [vmem:[%s205 + $0x380] sm:$0xff]
        %v372 = vld [vmem:[%s205 + $0x388] sm:$0xff]
        %v373 = vld [vmem:[%s205 + $0x390] sm:$0xff]
        %v374 = vld [vmem:[%s205 + $0x398] sm:$0xff]
        %v375 = vld [vmem:[%s205 + $0x3a0] sm:$0xff]
        %v376 = vld [vmem:[%s205 + $0x3a8] sm:$0xff]
        %v377 = vld [vmem:[%s205 + $0x3b0] sm:$0xff]
        %v378 = vld [vmem:[%s205 + $0x3b8] sm:$0xff]
        %v379 = vld [vmem:[%s205 + $0x3c0] sm:$0xff]
        %v380 = vld [vmem:[%s205 + $0x3c8] sm:$0xff]
        %v381 = vld [vmem:[%s205 + $0x3d0] sm:$0xff]
        %v382 = vld [vmem:[%s205 + $0x3d8] sm:$0xff]
        %v383 = vld [vmem:[%s205 + $0x3e0] sm:$0xff]
        %v384 = vld [vmem:[%s205 + $0x3e8] sm:$0xff]
        %v385 = vld [vmem:[%s205 + $0x3f0] sm:$0xff]
        %v386 = vld [vmem:[%s205 + $0x3f8] sm:$0xff]
        %388 = vst [vmem:[#allocation1] ss:$4 sm:$0xff] %v258
        %v389 = vld.sshfl [vmem:[#allocation1] sm:$0xff pattern:$0x73625140]
        %v390 = vld.sshfl [vmem:[#allocation1 + $0x8] sm:$0xff pattern:$0x73625140]
        %393 = vmatpush.msra.mxu0 %v319
        %394 = vmatpush.msra.mxu0 %v315
        %395 = vmatpush.msra.mxu0 %v311
        %396 = vmatpush.msra.mxu0 %v307
        %397 = vmatpush.msra.mxu0 %v303
        %398 = vmatpush.msra.mxu0 %v299
        %399 = vmatpush.msra.mxu0 %v295
        %400 = vmatpush.msra.mxu0 %v291
        %401 = vmatpush.msra.mxu0 %v287
        %402 = vmatpush.msra.mxu0 %v283
        %403 = vmatpush.msra.mxu0 %v279
        %404 = vmatpush.msra.mxu0 %v275
        %405 = vmatpush.msra.mxu0 %v271
        %406 = vmatpush.msra.mxu0 %v267
        %407 = vmatpush.msra.mxu0 %v263
        %408 = vmatpush.msra.mxu0 %v259
        %409 = vmatmul.f32.gmra.mxu0 %v389
        %v410 = vpop.f32.mrf.mxu0
        %v411 = vadd.f32 0.0, %v410
        %412 = vdwg.mxu0
        %413 = vmatpush.msra.mxu0 %v383
        %414 = vmatpush.msra.mxu0 %v379
        %415 = vmatpush.msra.mxu0 %v375
        %416 = vmatpush.msra.mxu0 %v371
        %417 = vmatpush.msra.mxu0 %v367
        %418 = vmatpush.msra.mxu0 %v363
        %419 = vmatpush.msra.mxu0 %v359
        %420 = vmatpush.msra.mxu0 %v355
        %421 = vmatpush.msra.mxu0 %v351
        %422 = vmatpush.msra.mxu0 %v347
        %423 = vmatpush.msra.mxu0 %v343
        %424 = vmatpush.msra.mxu0 %v339
        %425 = vmatpush.msra.mxu0 %v335
        %426 = vmatpush.msra.mxu0 %v331
        %427 = vmatpush.msra.mxu0 %v327
        %428 = vmatpush.msra.mxu0 %v323
        %429 = vmatmul.f32.gmra.mxu0 %v390
        %v430 = vpop.f32.mrf.mxu0
        %v431 = vadd.f32 %v411, %v430
        %432 = vdwg.mxu0
        %433 = vmatpush.msra.mxu0 %v320
        %434 = vmatpush.msra.mxu0 %v316
        %435 = vmatpush.msra.mxu0 %v312
        %436 = vmatpush.msra.mxu0 %v308
        %437 = vmatpush.msra.mxu0 %v304
        %438 = vmatpush.msra.mxu0 %v300
        %439 = vmatpush.msra.mxu0 %v296
        %440 = vmatpush.msra.mxu0 %v292
        %441 = vmatpush.msra.mxu0 %v288
        %442 = vmatpush.msra.mxu0 %v284
        %443 = vmatpush.msra.mxu0 %v280
        %444 = vmatpush.msra.mxu0 %v276
        %445 = vmatpush.msra.mxu0 %v272
        %446 = vmatpush.msra.mxu0 %v268
        %447 = vmatpush.msra.mxu0 %v264
        %448 = vmatpush.msra.mxu0 %v260
        %449 = vmatmul.f32.gmra.mxu0 %v389
        %v450 = vpop.f32.mrf.mxu0
        %v451 = vadd.f32 0.0, %v450
        %452 = vdwg.mxu0
        %453 = vmatpush.msra.mxu0 %v384
        %454 = vmatpush.msra.mxu0 %v380
        %455 = vmatpush.msra.mxu0 %v376
        %456 = vmatpush.msra.mxu0 %v372
        %457 = vmatpush.msra.mxu0 %v368
        %458 = vmatpush.msra.mxu0 %v364
        %459 = vmatpush.msra.mxu0 %v360
        %460 = vmatpush.msra.mxu0 %v356
        %461 = vmatpush.msra.mxu0 %v352
        %462 = vmatpush.msra.mxu0 %v348
        %463 = vmatpush.msra.mxu0 %v344
        %464 = vmatpush.msra.mxu0 %v340
        %465 = vmatpush.msra.mxu0 %v336
        %466 = vmatpush.msra.mxu0 %v332
        %467 = vmatpush.msra.mxu0 %v328
        %468 = vmatpush.msra.mxu0 %v324
        %469 = vmatmul.f32.gmra.mxu0 %v390
        %v470 = vpop.f32.mrf.mxu0
        %v471 = vadd.f32 %v451, %v470
        %472 = vdwg.mxu0
        %473 = vmatpush.msra.mxu0 %v321
        %474 = vmatpush.msra.mxu0 %v317
        %475 = vmatpush.msra.mxu0 %v313
        %476 = vmatpush.msra.mxu0 %v309
        %477 = vmatpush.msra.mxu0 %v305
        %478 = vmatpush.msra.mxu0 %v301
        %479 = vmatpush.msra.mxu0 %v297
        %480 = vmatpush.msra.mxu0 %v293
        %481 = vmatpush.msra.mxu0 %v289
        %482 = vmatpush.msra.mxu0 %v285
        %483 = vmatpush.msra.mxu0 %v281
        %484 = vmatpush.msra.mxu0 %v277
        %485 = vmatpush.msra.mxu0 %v273
        %486 = vmatpush.msra.mxu0 %v269
        %487 = vmatpush.msra.mxu0 %v265
        %488 = vmatpush.msra.mxu0 %v261
        %489 = vmatmul.f32.gmra.mxu0 %v389
        %v490 = vpop.f32.mrf.mxu0
        %v491 = vadd.f32 0.0, %v490
        %492 = vdwg.mxu0
        %493 = vmatpush.msra.mxu0 %v385
        %494 = vmatpush.msra.mxu0 %v381
        %495 = vmatpush.msra.mxu0 %v377
        %496 = vmatpush.msra.mxu0 %v373
        %497 = vmatpush.msra.mxu0 %v369
        %498 = vmatpush.msra.mxu0 %v365
        %499 = vmatpush.msra.mxu0 %v361
        %500 = vmatpush.msra.mxu0 %v357
        %501 = vmatpush.msra.mxu0 %v353
        %502 = vmatpush.msra.mxu0 %v349
        %503 = vmatpush.msra.mxu0 %v345
        %504 = vmatpush.msra.mxu0 %v341
        %505 = vmatpush.msra.mxu0 %v337
        %506 = vmatpush.msra.mxu0 %v333
        %507 = vmatpush.msra.mxu0 %v329
        %508 = vmatpush.msra.mxu0 %v325
        %509 = vmatmul.f32.gmra.mxu0 %v390
        %v510 = vpop.f32.mrf.mxu0
        %v511 = vadd.f32 %v491, %v510
        %512 = vdwg.mxu0
        %513 = vmatpush.msra.mxu0 %v322
        %514 = vmatpush.msra.mxu0 %v318
        %515 = vmatpush.msra.mxu0 %v314
        %516 = vmatpush.msra.mxu0 %v310
        %517 = vmatpush.msra.mxu0 %v306
        %518 = vmatpush.msra.mxu0 %v302
        %519 = vmatpush.msra.mxu0 %v298
        %520 = vmatpush.msra.mxu0 %v294
        %521 = vmatpush.msra.mxu0 %v290
        %522 = vmatpush.msra.mxu0 %v286
        %523 = vmatpush.msra.mxu0 %v282
        %524 = vmatpush.msra.mxu0 %v278
        %525 = vmatpush.msra.mxu0 %v274
        %526 = vmatpush.msra.mxu0 %v270
        %527 = vmatpush.msra.mxu0 %v266
        %528 = vmatpush.msra.mxu0 %v262
        %529 = vmatmul.f32.gmra.mxu0 %v389
        %v530 = vpop.f32.mrf.mxu0
        %v531 = vadd.f32 0.0, %v530
        %532 = vdwg.mxu0
        %533 = vmatpush.msra.mxu0 %v386
        %534 = vmatpush.msra.mxu0 %v382
        %535 = vmatpush.msra.mxu0 %v378
        %536 = vmatpush.msra.mxu0 %v374
        %537 = vmatpush.msra.mxu0 %v370
        %538 = vmatpush.msra.mxu0 %v366
        %539 = vmatpush.msra.mxu0 %v362
        %540 = vmatpush.msra.mxu0 %v358
        %541 = vmatpush.msra.mxu0 %v354
        %542 = vmatpush.msra.mxu0 %v350
        %543 = vmatpush.msra.mxu0 %v346
        %544 = vmatpush.msra.mxu0 %v342
        %545 = vmatpush.msra.mxu0 %v338
        %546 = vmatpush.msra.mxu0 %v334
        %547 = vmatpush.msra.mxu0 %v330
        %548 = vmatpush.msra.mxu0 %v326
        %549 = vmatmul.f32.gmra.mxu0 %v390
        %v550 = vpop.f32.mrf.mxu0
        %v551 = vadd.f32 %v531, %v550
        %552 = vdwg.mxu0
        %v557 = vrot.slane %v471, 6
        %v558 = vrot.slane %v511, 4
        %v559 = vrot.slane %v551, 2
        %vm560 = vcmask 1041408
        %v561 = vsel %vm560, %v431, %v557
        %vm562 = vcmask 1045508
        %v563 = vsel %vm562, %v558, %v559
        %vm564 = vcmask 1043456
        %v565 = vsel %vm564, %v561, %v563
        %v567 = vadd.f32 %v257, %v565
        %568 = vst [vmem:[%s237] sm:$0xff] %v567
        // Predicated region
        $region41: #{wrapped_vit_forward.1} parent=31 // pred_check
          %p569 = pneg %p252
        $region42: #{wrapped_vit_forward.1} parent=31 // pred_check_branch
          %571 = sbr.rel (%p569) target = $region44
        $region43: #{wrapped_vit_forward.1} parent=31 // pred_region
          %v572 = vld [vmem:[%s237] sm:$0xff]
          %v573 = vld [vmem:[%s249] sm:$0xf]
          %v575 = vperm.slane %v573, 0
          %v576 = vperm.slane %v573, 1
          %v577 = vperm.slane %v573, 2
          %v578 = vperm.slane %v573, 3
          %v579 = vrot.slane %v576, 6
          %v580 = vrot.slane %v577, 4
          %v581 = vrot.slane %v578, 2
          %v582 = vsel %vm560, %v575, %v579
          %v583 = vsel %vm562, %v580, %v581
          %v584 = vsel %vm564, %v582, %v583
          %v586 = vadd.f32 %v572, %v584
          %587 = vst [vmem:[%s237] sm:$0xff] %v586
        $region44: #{wrapped_vit_forward.1} parent=31 // pred_fallthru
          _
        %s588 = sand.u32 %s120, 1
        %s589 = scalar_lea.sflag [#allocation4], %s588
        %s590 = sand.u32 %s120, 1
        %s591 = smul.addr %s590, 8
        %s592 = scalar_lea.vmem [#allocation5], %s591
        // Predicated region
        $region45: #{wrapped_vit_forward.1} parent=31 // pred_check
          %p593 = pneg %p130
        $region46: #{wrapped_vit_forward.1} parent=31 // pred_check_branch
          %595 = sbr.rel (%p593) target = $region48
        $region47: #{wrapped_vit_forward.1} parent=31 // pred_region
          %s596 = smul.u32 4, %s24
          %598 = vsyncadd %s589, 0
          %s599 = smul.addr %s596, 2
          %s600 = scalar_lea.hbm %s3, %s599
          %s602 = sshll.u32 %s592, 4
          %s603 = int_to_ptr.vmem [resolvable:$true] %s602
          %s604 = sshll.u32 %s600, 4
          %s605 = int_to_ptr.hbm [resolvable:$true] %s604
          %607 = dma.vmem_to_hbm [thread:$0]  %s603, 128, %s605, %s589
        $region48: #{wrapped_vit_forward.1} parent=31 // pred_fallthru
          _
      $region32: #{wrapped_vit_forward.1} parent=5 // pred_fallthru
        _
      %p608 = scmp.le.s32.totalorder 2, %s15
      // Predicated region
      $region49: #{wrapped_vit_forward.1} parent=5 // pred_check
        %p609 = pneg %p608
      $region50: #{wrapped_vit_forward.1} parent=5 // pred_check_branch
        %611 = sbr.rel (%p609) target = $region52
      $region51: #{wrapped_vit_forward.1} parent=5 // pred_region
        %s612 = ssub.s32 %s15, 2
        // Predicated region
        $region53: #{wrapped_vit_forward.1} parent=51 // pred_check
          %p613 = pneg %p136
        $region54: #{wrapped_vit_forward.1} parent=51 // pred_check_branch
          %615 = sbr.rel (%p613) target = $region56
        $region55: #{wrapped_vit_forward.1} parent=51 // pred_region
          %s616 = sand.u32 %s121, 1
          %s617 = scalar_lea.sflag [#allocation4], %s616
          %s618 = sand.u32 %s121, 1
          %s619 = smul.addr %s618, 8
          %s620 = scalar_lea.vmem [#allocation5], %s619
          %622 = dma.done %s617, 128
        $region56: #{wrapped_vit_forward.1} parent=51 // pred_fallthru
          _
      $region52: #{wrapped_vit_forward.1} parent=5 // pred_fallthru
        _
    $region6: #{wrapped_vit_forward.1} parent=1 // loop_footer
      %s19 = sadd.s32 1, %s15
    $region7: #{wrapped_vit_forward.1} parent=1 // loop_footer_branch
      %14 = sbr.rel target = $region3
    $region8: #{wrapped_vit_forward.1} parent=1 // loop_exit
      _
    %623 = vsyncpa [#allocation3], 1
    %s624 = scalar_lea.sflag [#allocation3], 1
    %625 = vsyncpa %s624, 1
    %626 = vsyncpa [#allocation4], 1
    %s627 = scalar_lea.sflag [#allocation4], 1
    %628 = vsyncpa %s627, 1

</llo_original>
